<compile_context>
chip_gen: v5e
topology: v5e:2x2
jax: 0.10.0
libtpu: 0.0.40
codegen_flags: <defaults>
</compile_context>

<pallas_src>
import math
import functools

import numpy as np
import jax
import jax.numpy as jnp
from jax.experimental import pallas as pl
from jax.experimental.pallas import tpu as pltpu


def _mha_kernel(n_head, head_dim, xT_ref, wqkv_ref, bqkv_ref, wp_ref, bp_ref,
                oT_ref, h_ref):
    """Feature-major MHA forward for one (D, tb) batch tile (batch on the lane axis)."""
    D = n_head * head_dim
    tb = xT_ref.shape[1]

    # Single upcast at entry (keeps all VPU/EUP math f32 — required on v5e; bf16 I/O
    # still halves the HBM traffic this kernel is bound by on v6e/v7x).
    xT = xT_ref[...].astype(jnp.float32)                                    # (D, tb)

    # Fused QKV projection: (3D, D) @ (D, tb) -> (3D, tb).  N = tb fills the MXU lane
    # dim; bias broadcasts along lanes; the 1/sqrt(hd) scale is pre-folded into Q rows.
    qkv = (jnp.dot(wqkv_ref[...], xT, preferred_element_type=jnp.float32)
           + bqkv_ref[...])                                                 # (3D, tb)

    # Head blocks are static, sublane-aligned row slices; the reshape splits the row
    # axis at natural (8-sublane) vreg boundaries for hd = 8.
    k3 = qkv[D:2 * D, :].reshape(n_head, head_dim, tb)                      # (H, hd, tb)
    v3 = qkv[2 * D:3 * D, :].reshape(n_head, head_dim, tb)                  # (H, hd, tb)

    # Unrolled loop over query heads (n_head is tiny and static).  Every reduce below
    # is a sublane reduce with all tb lanes active (vs. the old 8-of-128-lane reduces).
    for n in range(n_head):
        qn = qkv[n * head_dim:(n + 1) * head_dim, :]                        # (hd, tb)
        # scores[m, b] = sum_d q[n,d,b] * k[m,d,b]   (scale already folded into q)
        scores = jnp.sum(qn[None, :, :] * k3, axis=1)                       # (H, tb)
        s_max = jnp.max(scores, axis=0, keepdims=True)                      # (1, tb)
        e = jnp.exp(scores - s_max)                                         # (H, tb)
        inv = pl.reciprocal(jnp.sum(e, axis=0, keepdims=True))              # exact
        w = e * inv                                                         # (H, tb)
        # Weighted sum of value heads: reducing over the leading key-head axis is pure
        # VPU adds; the result is exactly head n's output rows.
        hn = jnp.sum(w[:, None, :] * v3, axis=0)                            # (hd, tb)
        # Write into the VMEM slab at a static, 8-sublane-aligned offset (no
        # concatenate, no per-head partials held live across the unrolled loop).
        h_ref[n * head_dim:(n + 1) * head_dim, :] = hn

    # Single output projection (K = D); residual + projection bias folded into the
    # epilogue.  The store is lane-dense (unmasked vst).
    out = jnp.dot(wp_ref[...], h_ref[...], preferred_element_type=jnp.float32)
    oT_ref[...] = (out + (xT + bp_ref[...])).astype(oT_ref.dtype)


def prepare_mha_params(w_qkv, b_qkv, w_proj, b_proj, n_head):
    """One-time, host-side weight preparation (do NOT call per forward pass).

    Takes PyTorch nn.Linear weights ((out, in) convention):
      w_qkv (3D, D), b_qkv (3D,), w_proj (D, D), b_proj (D,)
    and returns device arrays for the feature-major kernel:
      * qkv rows permuted head-contiguously (Q block | K block | V block), matching
        reshape(B, n_head, 3hd).chunk(3, -1),
      * the 1/sqrt(head_dim) softmax scale folded into the Q rows / Q bias entries,
      * biases reshaped to columns for lane-broadcast,
      * no transposes needed in the feature-major convention (yT = W @ xT + b).
    """
    w_qkv = np.asarray(w_qkv, dtype=np.float32)
    b_qkv = np.asarray(b_qkv, dtype=np.float32)
    w_proj = np.asarray(w_proj, dtype=np.float32)
    b_proj = np.asarray(b_proj, dtype=np.float32)

    three_d, D = w_qkv.shape
    assert three_d == 3 * D and D % n_head == 0
    hd = D // n_head

    # Original output column (= weight row) layout per head h: [q_h | k_h | v_h].
    q_rows = np.concatenate([np.arange(h * 3 * hd, h * 3 * hd + hd) for h in range(n_head)])
    k_rows = q_rows + hd
    v_rows = q_rows + 2 * hd
    rows = np.concatenate([q_rows, k_rows, v_rows])

    w_fused = np.ascontiguousarray(w_qkv[rows, :])                          # (3D, D)
    b_fused = np.ascontiguousarray(b_qkv[rows]).astype(np.float32)          # (3D,)

    scale = 1.0 / math.sqrt(hd)
    w_fused[:D] *= scale                                                    # fold softmax scale
    b_fused[:D] *= scale

    return dict(
        w_qkv=jnp.asarray(w_fused),                                         # (3D, D)
        b_qkv=jnp.asarray(b_fused.reshape(3 * D, 1)),                       # (3D, 1)
        w_proj=jnp.asarray(np.ascontiguousarray(w_proj)),                   # (D, D)
        b_proj=jnp.asarray(b_proj.reshape(D, 1)),                           # (D, 1)
        n_head=int(n_head),
        head_dim=int(hd),
    )


def _pick_batch_block(B):
    """Batch-tile heuristic (sweep 512-2048 for production shapes after profiling)."""
    # Small or non-128-divisible batches: one full block.  Avoids masked lanes, padded
    # tail rows, and per-step overhead on single-TC v5e/v6e.
    if B <= 256 or B % 128 != 0:
        return B
    # Large batches: lane-dense tiles (multiple of 128) that divide B exactly, with
    # >= 2 grid steps so dimension_semantics=("parallel",) can shard across v7x's two
    # TensorCores; capped so per-step VMEM/vreg pressure stays modest.
    tb = min(1024, B // 2)
    tb = (tb // 128) * 128
    while B % tb != 0:
        tb -= 128
    return tb


def multi_head_attention_fm(xT, params, *, batch_block=None):
    """Feature-major MHA: xT is (D, B) with the batch on the lane axis (lane-dense)."""
    D, B = xT.shape
    n_head = params["n_head"]
    hd = params["head_dim"]
    assert D == n_head * hd

    tb = _pick_batch_block(B) if batch_block is None else batch_block
    assert tb == B or (tb % 128 == 0 and B % tb == 0), (
        "batch tile must equal B, or be a lane-dense multiple of 128 dividing B")
    grid = (B // tb,)

    kernel = functools.partial(_mha_kernel, n_head, hd)

    # Per-step VMEM: double-buffered xT/out tiles (D*tb*4 B each) + resident weights
    # (~25 KB at D=32) + one (D, tb) f32 slab — far below the default scoped limit even
    # on v7x (64 MiB physical / 32 MiB scoped).  Re-budget (vmem_limit_bytes, and
    # pl.Buffered(1) on the grid-invariant weight specs) only once D or tb grows.
    return pl.pallas_call(
        kernel,
        out_shape=jax.ShapeDtypeStruct((D, B), xT.dtype),
        grid=grid,
        in_specs=[
            pl.BlockSpec((D, tb), lambda i: (0, i)),          # xT: batch tiled on lanes
            pl.BlockSpec((3 * D, D), lambda i: (0, 0)),       # fused qkv weight (resident)
            pl.BlockSpec((3 * D, 1), lambda i: (0, 0)),       # fused qkv bias (column)
            pl.BlockSpec((D, D), lambda i: (0, 0)),           # proj weight (resident)
            pl.BlockSpec((D, 1), lambda i: (0, 0)),           # proj bias (column)
        ],
        out_specs=pl.BlockSpec((D, tb), lambda i: (0, i)),
        scratch_shapes=[pltpu.VMEM((D, tb), jnp.float32)],    # head-output slab
        compiler_params=pltpu.CompilerParams(dimension_semantics=("parallel",)),
    )(xT, params["w_qkv"], params["b_qkv"], params["w_proj"], params["b_proj"])


def multi_head_attention(x, params, *, batch_block=None):
    """Drop-in (B, D) wrapper: transposes to/from the lane-dense feature-major layout.

    In the full ATransformer stack, keep activations feature-major between blocks and
    call multi_head_attention_fm directly so these transposes amortize to the model
    boundary (layout plumbing, not per-block cost).
    """
    return multi_head_attention_fm(x.T, params, batch_block=batch_block).T


def reference(x, w_qkv, b_qkv, w_proj, b_proj, n_head):
    """Pure-JAX transcription of the PyTorch MultiHeadAttention.forward (verification)."""
    B, D = x.shape
    qkv = x @ w_qkv.T + b_qkv
    qkv = qkv.reshape(B, n_head, -1)
    q, k, v = jnp.split(qkv, 3, axis=-1)
    score = jnp.einsum('bnh,bmh->bnm', q, k) / math.sqrt(D // n_head)
    score = jax.nn.softmax(score, axis=-1)
    h = jnp.einsum('bnm,bmh->bnh', score, v).reshape(B, D)
    return x + h @ w_proj.T + b_proj


if __name__ == "__main__":
    B, D, n_head = 16, 32, 4

    key = jax.random.PRNGKey(0)
    k_x, k_w1, k_b1, k_w2, k_b2 = jax.random.split(key, 5)

    # Deterministic parameter init (PyTorch-Linear-like uniform bounds).
    bound = 1.0 / math.sqrt(D)
    x = jax.random.normal(k_x, (B, D), dtype=jnp.float32)
    w_qkv = jax.random.uniform(k_w1, (3 * D, D), minval=-bound, maxval=bound, dtype=jnp.float32)
    b_qkv = jax.random.uniform(k_b1, (3 * D,), minval=-bound, maxval=bound, dtype=jnp.float32)
    w_proj = jax.random.uniform(k_w2, (D, D), minval=-bound, maxval=bound, dtype=jnp.float32)
    b_proj = jax.random.uniform(k_b2, (D,), minval=-bound, maxval=bound, dtype=jnp.float32)

    # One-time host-side weight prep (head permutation + QKV fusion + scale folding).
    params = prepare_mha_params(w_qkv, b_qkv, w_proj, b_proj, n_head)

    # Small batch -> single full block (no grid splitting on single-TC v5e/v6e).
    out = jax.block_until_ready(multi_head_attention(x, params))
    ref = jax.block_until_ready(reference(x, w_qkv, b_qkv, w_proj, b_proj, n_head))
    # Exact reciprocal in the softmax -> tolerance tightened vs. the previous version;
    # kept conservative to cover MXU f32 pass behavior across TPU generations.
    np.testing.assert_allclose(np.asarray(out), np.asarray(ref), rtol=1e-3, atol=1e-3)

    # bf16 activation I/O (the v6e/v7x bandwidth optimization): weights stay f32, the
    # kernel upcasts once at entry and casts back only at the store.
    out_bf16 = jax.block_until_ready(multi_head_attention(x.astype(jnp.bfloat16), params))
    np.testing.assert_allclose(np.asarray(out_bf16, dtype=np.float32), np.asarray(ref),
                               rtol=5e-2, atol=5e-2)

    print("KERNEL_OK")
</pallas_src>

<mosaic_0001>
module attributes {stable_mosaic.version = 11 : i64} {
  func.func @_mha_kernel(%arg0: i32, %arg1: memref<32x16xf32, #tpu.memory_space<vmem>>, %arg2: memref<96x32xf32, #tpu.memory_space<vmem>>, %arg3: memref<96x1xf32, #tpu.memory_space<vmem>>, %arg4: memref<32x32xf32, #tpu.memory_space<vmem>>, %arg5: memref<32x1xf32, #tpu.memory_space<vmem>>, %arg6: memref<32x16xf32, #tpu.memory_space<vmem>>, %arg7: memref<32x16xf32, #tpu.memory_space<vmem>>) attributes {dimension_semantics = [#tpu.dimension_semantics<parallel>], iteration_bounds = array<i64: 1>, scalar_prefetch = 0 : i64, scratch_operands = 1 : i64, tpu.core_type = #tpu.core_type<tc>, window_params = [{transform_indices = @transform_0, window_bounds = array<i64: 32, 16>}, {pipeline_mode = #tpu.pipeline_mode<synchronous>, transform_indices = @transform_1, window_bounds = array<i64: 96, 32>}, {pipeline_mode = #tpu.pipeline_mode<synchronous>, transform_indices = @transform_2, window_bounds = array<i64: 96, 1>}, {pipeline_mode = #tpu.pipeline_mode<synchronous>, transform_indices = @transform_3, window_bounds = array<i64: 32, 32>}, {pipeline_mode = #tpu.pipeline_mode<synchronous>, transform_indices = @transform_4, window_bounds = array<i64: 32, 1>}, {transform_indices = @transform_5, window_bounds = array<i64: 32, 16>}]} {
    %c0 = arith.constant 0 : index
    %c0_0 = arith.constant 0 : index
    %0 = vector.load %arg1[%c0, %c0_0] : memref<32x16xf32, #tpu.memory_space<vmem>>, vector<32x16xf32>
    %c0_1 = arith.constant 0 : index
    %c0_2 = arith.constant 0 : index
    %1 = vector.load %arg2[%c0_1, %c0_2] : memref<96x32xf32, #tpu.memory_space<vmem>>, vector<96x32xf32>
    %cst = arith.constant dense<0.000000e+00> : vector<96x16xf32>
    %2 = tpu.matmul %1, %0, %cst {dimension_numbers = #tpu.dot_dimension_numbers<[1], [0], [0], [1], [0, 0, 1, 1], [], []>} : vector<96x32xf32>, vector<32x16xf32>, vector<96x16xf32> -> vector<96x16xf32>
    %c0_3 = arith.constant 0 : index
    %c0_4 = arith.constant 0 : index
    %3 = vector.load %arg3[%c0_3, %c0_4] : memref<96x1xf32, #tpu.memory_space<vmem>>, vector<96x1xf32>
    %4 = vector.broadcast %3 : vector<96x1xf32> to vector<96x16xf32>
    %5 = arith.addf %2, %4 : vector<96x16xf32>
    %6 = vector.extract_strided_slice %5 {offsets = [32, 0], sizes = [32, 16], strides = [1, 1]} : vector<96x16xf32> to vector<32x16xf32>
    %7 = vector.shape_cast %6 : vector<32x16xf32> to vector<4x8x16xf32>
    %8 = vector.extract_strided_slice %5 {offsets = [64, 0], sizes = [32, 16], strides = [1, 1]} : vector<96x16xf32> to vector<32x16xf32>
    %9 = vector.shape_cast %8 : vector<32x16xf32> to vector<4x8x16xf32>
    %10 = vector.extract_strided_slice %5 {offsets = [0, 0], sizes = [8, 16], strides = [1, 1]} : vector<96x16xf32> to vector<8x16xf32>
    %11 = vector.shape_cast %10 : vector<8x16xf32> to vector<1x8x16xf32>
    %12 = vector.broadcast %11 : vector<1x8x16xf32> to vector<4x8x16xf32>
    %13 = arith.mulf %12, %7 : vector<4x8x16xf32>
    %cst_5 = arith.constant dense<0.000000e+00> : vector<4x16xf32>
    %14 = vector.multi_reduction <add>, %13, %cst_5 [1] : vector<4x8x16xf32> to vector<4x16xf32>
    %cst_6 = arith.constant dense<0xFF800000> : vector<16xf32>
    %15 = vector.multi_reduction <maximumf>, %14, %cst_6 [0] : vector<4x16xf32> to vector<16xf32>
    %16 = vector.shape_cast %15 : vector<16xf32> to vector<1x16xf32>
    %17 = vector.broadcast %16 : vector<1x16xf32> to vector<4x16xf32>
    %18 = arith.subf %14, %17 : vector<4x16xf32>
    %19 = math.exp %18 : vector<4x16xf32>
    %cst_7 = arith.constant dense<0.000000e+00> : vector<16xf32>
    %20 = vector.multi_reduction <add>, %19, %cst_7 [0] : vector<4x16xf32> to vector<16xf32>
    %21 = vector.shape_cast %20 : vector<16xf32> to vector<1x16xf32>
    %22 = tpu.reciprocal %21 : vector<1x16xf32> -> vector<1x16xf32>
    %23 = vector.broadcast %22 : vector<1x16xf32> to vector<4x16xf32>
    %24 = arith.mulf %19, %23 : vector<4x16xf32>
    %25 = vector.shape_cast %24 : vector<4x16xf32> to vector<4x1x16xf32>
    %26 = vector.broadcast %25 : vector<4x1x16xf32> to vector<4x8x16xf32>
    %27 = arith.mulf %26, %9 : vector<4x8x16xf32>
    %cst_8 = arith.constant dense<0.000000e+00> : vector<8x16xf32>
    %28 = vector.multi_reduction <add>, %27, %cst_8 [0] : vector<4x8x16xf32> to vector<8x16xf32>
    %c0_9 = arith.constant 0 : index
    %c0_10 = arith.constant 0 : index
    %29 = vector.load %arg7[%c0_9, %c0_10] : memref<32x16xf32, #tpu.memory_space<vmem>>, vector<8x16xf32>
    tpu.vector_store %arg7[%c0_9, %c0_10], %28 {strides = array<i32>} : memref<32x16xf32, #tpu.memory_space<vmem>>, vector<8x16xf32>,
    %30 = vector.extract_strided_slice %5 {offsets = [8, 0], sizes = [8, 16], strides = [1, 1]} : vector<96x16xf32> to vector<8x16xf32>
    %31 = vector.shape_cast %30 : vector<8x16xf32> to vector<1x8x16xf32>
    %32 = vector.broadcast %31 : vector<1x8x16xf32> to vector<4x8x16xf32>
    %33 = arith.mulf %32, %7 : vector<4x8x16xf32>
    %cst_11 = arith.constant dense<0.000000e+00> : vector<4x16xf32>
    %34 = vector.multi_reduction <add>, %33, %cst_11 [1] : vector<4x8x16xf32> to vector<4x16xf32>
    %cst_12 = arith.constant dense<0xFF800000> : vector<16xf32>
    %35 = vector.multi_reduction <maximumf>, %34, %cst_12 [0] : vector<4x16xf32> to vector<16xf32>
    %36 = vector.shape_cast %35 : vector<16xf32> to vector<1x16xf32>
    %37 = vector.broadcast %36 : vector<1x16xf32> to vector<4x16xf32>
    %38 = arith.subf %34, %37 : vector<4x16xf32>
    %39 = math.exp %38 : vector<4x16xf32>
    %cst_13 = arith.constant dense<0.000000e+00> : vector<16xf32>
    %40 = vector.multi_reduction <add>, %39, %cst_13 [0] : vector<4x16xf32> to vector<16xf32>
    %41 = vector.shape_cast %40 : vector<16xf32> to vector<1x16xf32>
    %42 = tpu.reciprocal %41 : vector<1x16xf32> -> vector<1x16xf32>
    %43 = vector.broadcast %42 : vector<1x16xf32> to vector<4x16xf32>
    %44 = arith.mulf %39, %43 : vector<4x16xf32>
    %45 = vector.shape_cast %44 : vector<4x16xf32> to vector<4x1x16xf32>
    %46 = vector.broadcast %45 : vector<4x1x16xf32> to vector<4x8x16xf32>
    %47 = arith.mulf %46, %9 : vector<4x8x16xf32>
    %cst_14 = arith.constant dense<0.000000e+00> : vector<8x16xf32>
    %48 = vector.multi_reduction <add>, %47, %cst_14 [0] : vector<4x8x16xf32> to vector<8x16xf32>
    %c8 = arith.constant 8 : index
    %c0_15 = arith.constant 0 : index
    %49 = vector.load %arg7[%c8, %c0_15] : memref<32x16xf32, #tpu.memory_space<vmem>>, vector<8x16xf32>
    tpu.vector_store %arg7[%c8, %c0_15], %48 {strides = array<i32>} : memref<32x16xf32, #tpu.memory_space<vmem>>, vector<8x16xf32>,
    %50 = vector.extract_strided_slice %5 {offsets = [16, 0], sizes = [8, 16], strides = [1, 1]} : vector<96x16xf32> to vector<8x16xf32>
    %51 = vector.shape_cast %50 : vector<8x16xf32> to vector<1x8x16xf32>
    %52 = vector.broadcast %51 : vector<1x8x16xf32> to vector<4x8x16xf32>
    %53 = arith.mulf %52, %7 : vector<4x8x16xf32>
    %cst_16 = arith.constant dense<0.000000e+00> : vector<4x16xf32>
    %54 = vector.multi_reduction <add>, %53, %cst_16 [1] : vector<4x8x16xf32> to vector<4x16xf32>
    %cst_17 = arith.constant dense<0xFF800000> : vector<16xf32>
    %55 = vector.multi_reduction <maximumf>, %54, %cst_17 [0] : vector<4x16xf32> to vector<16xf32>
    %56 = vector.shape_cast %55 : vector<16xf32> to vector<1x16xf32>
    %57 = vector.broadcast %56 : vector<1x16xf32> to vector<4x16xf32>
    %58 = arith.subf %54, %57 : vector<4x16xf32>
    %59 = math.exp %58 : vector<4x16xf32>
    %cst_18 = arith.constant dense<0.000000e+00> : vector<16xf32>
    %60 = vector.multi_reduction <add>, %59, %cst_18 [0] : vector<4x16xf32> to vector<16xf32>
    %61 = vector.shape_cast %60 : vector<16xf32> to vector<1x16xf32>
    %62 = tpu.reciprocal %61 : vector<1x16xf32> -> vector<1x16xf32>
    %63 = vector.broadcast %62 : vector<1x16xf32> to vector<4x16xf32>
    %64 = arith.mulf %59, %63 : vector<4x16xf32>
    %65 = vector.shape_cast %64 : vector<4x16xf32> to vector<4x1x16xf32>
    %66 = vector.broadcast %65 : vector<4x1x16xf32> to vector<4x8x16xf32>
    %67 = arith.mulf %66, %9 : vector<4x8x16xf32>
    %cst_19 = arith.constant dense<0.000000e+00> : vector<8x16xf32>
    %68 = vector.multi_reduction <add>, %67, %cst_19 [0] : vector<4x8x16xf32> to vector<8x16xf32>
    %c16 = arith.constant 16 : index
    %c0_20 = arith.constant 0 : index
    %69 = vector.load %arg7[%c16, %c0_20] : memref<32x16xf32, #tpu.memory_space<vmem>>, vector<8x16xf32>
    tpu.vector_store %arg7[%c16, %c0_20], %68 {strides = array<i32>} : memref<32x16xf32, #tpu.memory_space<vmem>>, vector<8x16xf32>,
    %70 = vector.extract_strided_slice %5 {offsets = [24, 0], sizes = [8, 16], strides = [1, 1]} : vector<96x16xf32> to vector<8x16xf32>
    %71 = vector.shape_cast %70 : vector<8x16xf32> to vector<1x8x16xf32>
    %72 = vector.broadcast %71 : vector<1x8x16xf32> to vector<4x8x16xf32>
    %73 = arith.mulf %72, %7 : vector<4x8x16xf32>
    %cst_21 = arith.constant dense<0.000000e+00> : vector<4x16xf32>
    %74 = vector.multi_reduction <add>, %73, %cst_21 [1] : vector<4x8x16xf32> to vector<4x16xf32>
    %cst_22 = arith.constant dense<0xFF800000> : vector<16xf32>
    %75 = vector.multi_reduction <maximumf>, %74, %cst_22 [0] : vector<4x16xf32> to vector<16xf32>
    %76 = vector.shape_cast %75 : vector<16xf32> to vector<1x16xf32>
    %77 = vector.broadcast %76 : vector<1x16xf32> to vector<4x16xf32>
    %78 = arith.subf %74, %77 : vector<4x16xf32>
    %79 = math.exp %78 : vector<4x16xf32>
    %cst_23 = arith.constant dense<0.000000e+00> : vector<16xf32>
    %80 = vector.multi_reduction <add>, %79, %cst_23 [0] : vector<4x16xf32> to vector<16xf32>
    %81 = vector.shape_cast %80 : vector<16xf32> to vector<1x16xf32>
    %82 = tpu.reciprocal %81 : vector<1x16xf32> -> vector<1x16xf32>
    %83 = vector.broadcast %82 : vector<1x16xf32> to vector<4x16xf32>
    %84 = arith.mulf %79, %83 : vector<4x16xf32>
    %85 = vector.shape_cast %84 : vector<4x16xf32> to vector<4x1x16xf32>
    %86 = vector.broadcast %85 : vector<4x1x16xf32> to vector<4x8x16xf32>
    %87 = arith.mulf %86, %9 : vector<4x8x16xf32>
    %cst_24 = arith.constant dense<0.000000e+00> : vector<8x16xf32>
    %88 = vector.multi_reduction <add>, %87, %cst_24 [0] : vector<4x8x16xf32> to vector<8x16xf32>
    %c24 = arith.constant 24 : index
    %c0_25 = arith.constant 0 : index
    %89 = vector.load %arg7[%c24, %c0_25] : memref<32x16xf32, #tpu.memory_space<vmem>>, vector<8x16xf32>
    tpu.vector_store %arg7[%c24, %c0_25], %88 {strides = array<i32>} : memref<32x16xf32, #tpu.memory_space<vmem>>, vector<8x16xf32>,
    %c0_26 = arith.constant 0 : index
    %c0_27 = arith.constant 0 : index
    %90 = vector.load %arg4[%c0_26, %c0_27] : memref<32x32xf32, #tpu.memory_space<vmem>>, vector<32x32xf32>
    %c0_28 = arith.constant 0 : index
    %c0_29 = arith.constant 0 : index
    %91 = vector.load %arg7[%c0_28, %c0_29] : memref<32x16xf32, #tpu.memory_space<vmem>>, vector<32x16xf32>
    %cst_30 = arith.constant dense<0.000000e+00> : vector<32x16xf32>
    %92 = tpu.matmul %90, %91, %cst_30 {dimension_numbers = #tpu.dot_dimension_numbers<[1], [0], [0], [1], [0, 0, 1, 1], [], []>} : vector<32x32xf32>, vector<32x16xf32>, vector<32x16xf32> -> vector<32x16xf32>
    %c0_31 = arith.constant 0 : index
    %c0_32 = arith.constant 0 : index
    %93 = vector.load %arg5[%c0_31, %c0_32] : memref<32x1xf32, #tpu.memory_space<vmem>>, vector<32x1xf32>
    %94 = vector.broadcast %93 : vector<32x1xf32> to vector<32x16xf32>
    %95 = arith.addf %0, %94 : vector<32x16xf32>
    %96 = arith.addf %92, %95 : vector<32x16xf32>
    %c0_33 = arith.constant 0 : index
    %c0_34 = arith.constant 0 : index
    %97 = vector.load %arg6[%c0_33, %c0_34] : memref<32x16xf32, #tpu.memory_space<vmem>>, vector<32x16xf32>
    tpu.vector_store %arg6[%c0_33, %c0_34], %96 {strides = array<i32>} : memref<32x16xf32, #tpu.memory_space<vmem>>, vector<32x16xf32>,
    return
  }
  func.func @transform_0(%arg0: i32) -> (i32, i32) {
    %c0_i32 = arith.constant 0 : i32
    %c0_i32_0 = arith.constant 0 : i32
    return %c0_i32, %arg0 : i32, i32
  }
  func.func @transform_1(%arg0: i32) -> (i32, i32) {
    %c0_i32 = arith.constant 0 : i32
    %c0_i32_0 = arith.constant 0 : i32
    %c0_i32_1 = arith.constant 0 : i32
    return %c0_i32, %c0_i32_0 : i32, i32
  }
  func.func @transform_2(%arg0: i32) -> (i32, i32) {
    %c0_i32 = arith.constant 0 : i32
    %c0_i32_0 = arith.constant 0 : i32
    %c0_i32_1 = arith.constant 0 : i32
    return %c0_i32, %c0_i32_0 : i32, i32
  }
  func.func @transform_3(%arg0: i32) -> (i32, i32) {
    %c0_i32 = arith.constant 0 : i32
    %c0_i32_0 = arith.constant 0 : i32
    %c0_i32_1 = arith.constant 0 : i32
    return %c0_i32, %c0_i32_0 : i32, i32
  }
  func.func @transform_4(%arg0: i32) -> (i32, i32) {
    %c0_i32 = arith.constant 0 : i32
    %c0_i32_0 = arith.constant 0 : i32
    %c0_i32_1 = arith.constant 0 : i32
    return %c0_i32, %c0_i32_0 : i32, i32
  }
  func.func @transform_5(%arg0: i32) -> (i32, i32) {
    %c0_i32 = arith.constant 0 : i32
    %c0_i32_0 = arith.constant 0 : i32
    return %c0_i32, %arg0 : i32, i32
  }
}

</mosaic_0001>

<llo_original>
// kernel: tpu_custom_call.1
$region0: #{tpu_custom_call.1}
  #allocation0 [shape = 'u32[]', space=smem, size = 0x4, offset = 0x4, fixed_abs, tag = 'smem constant byte address 0x4 - core index']
  #allocation1 [shape = 'u32[72,128]{1,0:T(1,128)}', space=vmem, size = 0x9000, scoped, tag = 'internal scratch']
  #allocation2 [shape = 'f32[32,16]{1,0:T(8,128)}', space=vmem, size = 0x4000, scoped, tag = 'scratch operand']
  %s0 = inlined_call_operand.vmem [shape: f32[32,16], index: 0, kind: input, shape index: {}]
  %s1 = inlined_call_operand.vmem [shape: f32[96,32], index: 1, kind: input, shape index: {}]
  %s2 = inlined_call_operand.vmem [shape: f32[96,1], index: 2, kind: input, shape index: {}]
  %s3 = inlined_call_operand.vmem [shape: f32[32,32], index: 3, kind: input, shape index: {}]
  %s4 = inlined_call_operand.vmem [shape: f32[32,1], index: 4, kind: input, shape index: {}]
  %s5 = inlined_call_operand.vmem [shape: f32[32,16], index: 5, kind: output, shape index: {}]
  %s6 = sld [smem:[#allocation0]]
  $region30: #{tpu_custom_call.1} parent=0
    _
  %s8 = ssub.s32 1, %s6
  %s9 = scalar_select 0, %s8, %s6
  // Predicated region
  $region2: #{tpu_custom_call.1} parent=0 // pred_check
    _
  $region3: #{tpu_custom_call.1} parent=0 // pred_check_branch
    %11 = sbr.rel (0) target = $region5
  $region4: #{tpu_custom_call.1} parent=0 // pred_region
    _
  $region5: #{tpu_custom_call.1} parent=0 // pred_fallthru
    _
  // Predicated region
  $region6: #{tpu_custom_call.1} parent=0 // pred_check
    _
  $region7: #{tpu_custom_call.1} parent=0 // pred_check_branch
    %13 = sbr.rel (0) target = $region9
  $region8: #{tpu_custom_call.1} parent=0 // pred_region
    _
  $region9: #{tpu_custom_call.1} parent=0 // pred_fallthru
    _
  // Predicated region
  $region10: #{tpu_custom_call.1} parent=0 // pred_check
    _
  $region11: #{tpu_custom_call.1} parent=0 // pred_check_branch
    %15 = sbr.rel (0) target = $region13
  $region12: #{tpu_custom_call.1} parent=0 // pred_region
    _
  $region13: #{tpu_custom_call.1} parent=0 // pred_fallthru
    _
  // Predicated region
  $region14: #{tpu_custom_call.1} parent=0 // pred_check
    _
  $region15: #{tpu_custom_call.1} parent=0 // pred_check_branch
    %17 = sbr.rel (0) target = $region17
  $region16: #{tpu_custom_call.1} parent=0 // pred_region
    _
  $region17: #{tpu_custom_call.1} parent=0 // pred_fallthru
    _
  // Predicated region
  $region18: #{tpu_custom_call.1} parent=0 // pred_check
    _
  $region19: #{tpu_custom_call.1} parent=0 // pred_check_branch
    %19 = sbr.rel (0) target = $region21
  $region20: #{tpu_custom_call.1} parent=0 // pred_region
    _
  $region21: #{tpu_custom_call.1} parent=0 // pred_fallthru
    _
  %v20 = vld [vmem:[%s0] sm:$0xff]
  %v21 = vld [vmem:[%s0 + $0x8] sm:$0xff]
  %v22 = vld [vmem:[%s0 + $0x10] sm:$0xff]
  %v23 = vld [vmem:[%s0 + $0x18] sm:$0xff]
  %v24 = vld [vmem:[%s1] sm:$0xff]
  %v25 = vld [vmem:[%s1 + $0x8] sm:$0xff]
  %v26 = vld [vmem:[%s1 + $0x10] sm:$0xff]
  %v27 = vld [vmem:[%s1 + $0x18] sm:$0xff]
  %v28 = vld [vmem:[%s1 + $0x20] sm:$0xff]
  %v29 = vld [vmem:[%s1 + $0x28] sm:$0xff]
  %v30 = vld [vmem:[%s1 + $0x30] sm:$0xff]
  %v31 = vld [vmem:[%s1 + $0x38] sm:$0xff]
  %v32 = vld [vmem:[%s1 + $0x40] sm:$0xff]
  %v33 = vld [vmem:[%s1 + $0x48] sm:$0xff]
  %v34 = vld [vmem:[%s1 + $0x50] sm:$0xff]
  %v35 = vld [vmem:[%s1 + $0x58] sm:$0xff]
  %v36 = vld [vmem:[%s2] sm:$0xff]
  %v37 = vld [vmem:[%s2 + $0x8] sm:$0xff]
  %v38 = vld [vmem:[%s2 + $0x10] sm:$0xff]
  %v39 = vld [vmem:[%s2 + $0x18] sm:$0xff]
  %v40 = vld [vmem:[%s2 + $0x20] sm:$0xff]
  %v41 = vld [vmem:[%s2 + $0x28] sm:$0xff]
  %v42 = vld [vmem:[%s2 + $0x30] sm:$0xff]
  %v43 = vld [vmem:[%s2 + $0x38] sm:$0xff]
  %v44 = vld [vmem:[%s2 + $0x40] sm:$0xff]
  %v45 = vld [vmem:[%s2 + $0x48] sm:$0xff]
  %v46 = vld [vmem:[%s2 + $0x50] sm:$0xff]
  %v47 = vld [vmem:[%s2 + $0x58] sm:$0xff]
  %49 = vset.pattern.permute.xlu0 0
  %50 = vperm.xlu0 %49, %v36
  %v51 = vpop.permute.xlu0 %50
  %54 = vset.pattern.permute.xlu0 0
  %55 = vperm.xlu0 %54, %v37
  %v56 = vpop.permute.xlu0 %55
  %59 = vset.pattern.permute.xlu0 0
  %60 = vperm.xlu0 %59, %v38
  %v61 = vpop.permute.xlu0 %60
  %64 = vset.pattern.permute.xlu0 0
  %65 = vperm.xlu0 %64, %v39
  %v66 = vpop.permute.xlu0 %65
  %69 = vset.pattern.permute.xlu0 0
  %70 = vperm.xlu0 %69, %v40
  %v71 = vpop.permute.xlu0 %70
  %74 = vset.pattern.permute.xlu0 0
  %75 = vperm.xlu0 %74, %v41
  %v76 = vpop.permute.xlu0 %75
  %79 = vset.pattern.permute.xlu0 0
  %80 = vperm.xlu0 %79, %v42
  %v81 = vpop.permute.xlu0 %80
  %84 = vset.pattern.permute.xlu0 0
  %85 = vperm.xlu0 %84, %v43
  %v86 = vpop.permute.xlu0 %85
  %89 = vset.pattern.permute.xlu0 0
  %90 = vperm.xlu0 %89, %v44
  %v91 = vpop.permute.xlu0 %90
  %94 = vset.pattern.permute.xlu0 0
  %95 = vperm.xlu0 %94, %v45
  %v96 = vpop.permute.xlu0 %95
  %99 = vset.pattern.permute.xlu0 0
  %100 = vperm.xlu0 %99, %v46
  %v101 = vpop.permute.xlu0 %100
  %104 = vset.pattern.permute.xlu0 0
  %105 = vperm.xlu0 %104, %v47
  %v106 = vpop.permute.xlu0 %105
  %vm108 = vcmask 261120
  %v110 = vsel %vm108, %v24, 0
  %v113 = vsel %vm108, %v25, 0
  %v116 = vsel %vm108, %v26, 0
  %v119 = vsel %vm108, %v27, 0
  %v122 = vsel %vm108, %v28, 0
  %v125 = vsel %vm108, %v29, 0
  %v128 = vsel %vm108, %v30, 0
  %v131 = vsel %vm108, %v31, 0
  %v134 = vsel %vm108, %v32, 0
  %v137 = vsel %vm108, %v33, 0
  %v140 = vsel %vm108, %v34, 0
  %v143 = vsel %vm108, %v35, 0
  %145 = vmatpush.msra.mxu0 0.0
  %146 = vmatpush.msra.mxu0 0.0
  %147 = vmatpush.msra.mxu0 0.0
  %148 = vmatpush.msra.mxu0 0.0
  %149 = vmatpush.msra.mxu0 0.0
  %150 = vmatpush.msra.mxu0 0.0
  %151 = vmatpush.msra.mxu0 0.0
  %152 = vmatpush.msra.mxu0 0.0
  %153 = vmatpush.msra.mxu0 0.0
  %154 = vmatpush.msra.mxu0 0.0
  %155 = vmatpush.msra.mxu0 0.0
  %156 = vmatpush.msra.mxu0 0.0
  %157 = vmatpush.msra.mxu0 %v23
  %158 = vmatpush.msra.mxu0 %v22
  %159 = vmatpush.msra.mxu0 %v21
  %160 = vmatpush.msra.mxu0 %v20
  %161 = vmatmul.f32.gmra.mxu0 %v110
  %v162 = vpop.f32.mrf.mxu0
  %v163 = vadd.f32 %v51, %v162
  %164 = vmatmul.f32.gmra.mxu0 %v113
  %v165 = vpop.f32.mrf.mxu0
  %v166 = vadd.f32 %v56, %v165
  %167 = vmatmul.f32.gmra.mxu0 %v116
  %v168 = vpop.f32.mrf.mxu0
  %v169 = vadd.f32 %v61, %v168
  %170 = vmatmul.f32.gmra.mxu0 %v119
  %v171 = vpop.f32.mrf.mxu0
  %v172 = vadd.f32 %v66, %v171
  %173 = vmatmul.f32.gmra.mxu0 %v122
  %v174 = vpop.f32.mrf.mxu0
  %v175 = vadd.f32 %v71, %v174
  %176 = vmatmul.f32.gmra.mxu0 %v125
  %v177 = vpop.f32.mrf.mxu0
  %v178 = vadd.f32 %v76, %v177
  %179 = vmatmul.f32.gmra.mxu0 %v128
  %v180 = vpop.f32.mrf.mxu0
  %v181 = vadd.f32 %v81, %v180
  %182 = vmatmul.f32.gmra.mxu0 %v131
  %v183 = vpop.f32.mrf.mxu0
  %v184 = vadd.f32 %v86, %v183
  %185 = vmatmul.f32.gmra.mxu0 %v134
  %v186 = vpop.f32.mrf.mxu0
  %v187 = vadd.f32 %v91, %v186
  %188 = vmatmul.f32.gmra.mxu0 %v137
  %v189 = vpop.f32.mrf.mxu0
  %v190 = vadd.f32 %v96, %v189
  %191 = vmatmul.f32.gmra.mxu0 %v140
  %v192 = vpop.f32.mrf.mxu0
  %v193 = vadd.f32 %v101, %v192
  %194 = vmatmul.f32.gmra.mxu0 %v143
  %v195 = vpop.f32.mrf.mxu0
  %v196 = vadd.f32 %v106, %v195
  %197 = vdwg.mxu0
  %v198 = vmul.f32 %v163, %v175
  %v199 = vmul.f32 %v163, %v178
  %v200 = vmul.f32 %v163, %v181
  %v201 = vmul.f32 %v163, %v184
  %vm202 = vcmask 130048
  %v203 = vsel %vm202, %v198, 0.0
  %v204 = vrot.slane %v203, 4
  %v205 = vadd.f32 %v203, %v204
  %v206 = vrot.slane %v205, 2
  %v207 = vadd.f32 %v205, %v206
  %v208 = vrot.slane %v207, 1
  %v209 = vadd.f32 %v207, %v208
  %v210 = vsel %vm202, %v199, 0.0
  %v211 = vrot.slane %v210, 4
  %v212 = vadd.f32 %v210, %v211
  %v213 = vrot.slane %v212, 2
  %v214 = vadd.f32 %v212, %v213
  %v215 = vrot.slane %v214, 1
  %v216 = vadd.f32 %v214, %v215
  %v217 = vsel %vm202, %v200, 0.0
  %v218 = vrot.slane %v217, 4
  %v219 = vadd.f32 %v217, %v218
  %v220 = vrot.slane %v219, 2
  %v221 = vadd.f32 %v219, %v220
  %v222 = vrot.slane %v221, 1
  %v223 = vadd.f32 %v221, %v222
  %v224 = vsel %vm202, %v201, 0.0
  %v225 = vrot.slane %v224, 4
  %v226 = vadd.f32 %v224, %v225
  %v227 = vrot.slane %v226, 2
  %v228 = vadd.f32 %v226, %v227
  %v229 = vrot.slane %v228, 1
  %v230 = vadd.f32 %v228, %v229
  %v231 = vsel %vm202, %v209, -inf
  %v232 = vsel %vm202, %v216, -inf
  %v233 = vsel %vm202, %v223, -inf
  %v234 = vsel %vm202, %v230, -inf
  %v235 = vmax.f32 %v231, %v232
  %v236 = vmax.f32 %v233, %v234
  %v237 = vmax.f32 %v235, %v236
  %v238 = vsub.f32 %v209, %v237
  %v239 = vsub.f32 %v216, %v237
  %v240 = vsub.f32 %v223, %v237
  %v241 = vsub.f32 %v230, %v237
  %v242 = vmul.f32 %v238, 1.442695
  %v243 = vpow.pop %v242
  %v244 = vmul.f32 %v239, 1.442695
  %v245 = vpow.pop %v244
  %v246 = vmul.f32 %v240, 1.442695
  %v247 = vpow.pop %v246
  %v248 = vmul.f32 %v241, 1.442695
  %v249 = vpow.pop %v248
  %v254 = vrot.slane %v245, 7
  %vm255 = vcmask 1041409
  %v256 = vsel %vm255, %v254, %v243
  %v257 = vrot.slane %v247, 6
  %vm258 = vcmask 1042434
  %v259 = vsel %vm258, %v257, %v256
  %v260 = vrot.slane %v249, 5
  %vm261 = vcmask 1043459
  %v262 = vsel %vm261, %v260, %v259
  %vm264 = vcmask 125952
  %v265 = vsel %vm264, %v262, 0.0
  %v266 = vrot.slane %v265, 4
  %v267 = vadd.f32 %v265, %v266
  %v268 = vrot.slane %v267, 2
  %v269 = vadd.f32 %v267, %v268
  %v270 = vrot.slane %v269, 1
  %v271 = vadd.f32 %v269, %v270
  %v272 = vrcp.pop %v271
  %v273 = vmul.f32 %v271, %v272
  %v274 = vsub.f32 1.0, %v273
  %v275 = vmul.f32 %v272, %v274
  %v276 = vadd.f32 %v272, %v275
  %vm277 = vweird.f32 %v271
  %vm278 = vweird.f32 %v272
  %vm279 = vmor %vm277, %vm278
  %v280 = vsel %vm279, %v272, %v276
  %v281 = vand.u32 2147483647, %v271
  %vm282 = vcmp.eq.f32.partialorder %v281, 8.507059e+37
  %v283 = vand.u32 %v271, 2147483648
  %v284 = vor.u32 1.1754944e-38, %v283
  %v285 = vsel %vm282, %v284, %v280
  %v286 = vperm.slane %v285, 0
  %v287 = vmul.f32 %v243, %v286
  %v288 = vmul.f32 %v245, %v286
  %v289 = vmul.f32 %v247, %v286
  %v290 = vmul.f32 %v249, %v286
  %v291 = vperm.slane %v287, 0
  %v292 = vperm.slane %v288, 0
  %v293 = vperm.slane %v289, 0
  %v294 = vperm.slane %v290, 0
  %v295 = vmul.f32 %v291, %v187
  %v296 = vmul.f32 %v292, %v190
  %v297 = vmul.f32 %v293, %v193
  %v298 = vmul.f32 %v294, %v196
  %v299 = vsel %vm202, %v295, 0.0
  %v300 = vsel %vm202, %v296, 0.0
  %v301 = vadd.f32 %v299, %v300
  %v302 = vsel %vm202, %v297, 0.0
  %v303 = vadd.f32 %v301, %v302
  %v304 = vsel %vm202, %v298, 0.0
  %v305 = vadd.f32 %v303, %v304
  %306 = vst.msk [vmem:[#allocation2] sm:$0xff] %vm202, %v305
  %v307 = vmul.f32 %v166, %v175
  %v308 = vmul.f32 %v166, %v178
  %v309 = vmul.f32 %v166, %v181
  %v310 = vmul.f32 %v166, %v184
  %v311 = vsel %vm202, %v307, 0.0
  %v312 = vrot.slane %v311, 4
  %v313 = vadd.f32 %v311, %v312
  %v314 = vrot.slane %v313, 2
  %v315 = vadd.f32 %v313, %v314
  %v316 = vrot.slane %v315, 1
  %v317 = vadd.f32 %v315, %v316
  %v318 = vsel %vm202, %v308, 0.0
  %v319 = vrot.slane %v318, 4
  %v320 = vadd.f32 %v318, %v319
  %v321 = vrot.slane %v320, 2
  %v322 = vadd.f32 %v320, %v321
  %v323 = vrot.slane %v322, 1
  %v324 = vadd.f32 %v322, %v323
  %v325 = vsel %vm202, %v309, 0.0
  %v326 = vrot.slane %v325, 4
  %v327 = vadd.f32 %v325, %v326
  %v328 = vrot.slane %v327, 2
  %v329 = vadd.f32 %v327, %v328
  %v330 = vrot.slane %v329, 1
  %v331 = vadd.f32 %v329, %v330
  %v332 = vsel %vm202, %v310, 0.0
  %v333 = vrot.slane %v332, 4
  %v334 = vadd.f32 %v332, %v333
  %v335 = vrot.slane %v334, 2
  %v336 = vadd.f32 %v334, %v335
  %v337 = vrot.slane %v336, 1
  %v338 = vadd.f32 %v336, %v337
  %v339 = vsel %vm202, %v317, -inf
  %v340 = vsel %vm202, %v324, -inf
  %v341 = vsel %vm202, %v331, -inf
  %v342 = vsel %vm202, %v338, -inf
  %v343 = vmax.f32 %v339, %v340
  %v344 = vmax.f32 %v341, %v342
  %v345 = vmax.f32 %v343, %v344
  %v346 = vsub.f32 %v317, %v345
  %v347 = vsub.f32 %v324, %v345
  %v348 = vsub.f32 %v331, %v345
  %v349 = vsub.f32 %v338, %v345
  %v350 = vmul.f32 %v346, 1.442695
  %v351 = vpow.pop %v350
  %v352 = vmul.f32 %v347, 1.442695
  %v353 = vpow.pop %v352
  %v354 = vmul.f32 %v348, 1.442695
  %v355 = vpow.pop %v354
  %v356 = vmul.f32 %v349, 1.442695
  %v357 = vpow.pop %v356
  %v362 = vrot.slane %v353, 7
  %v363 = vsel %vm255, %v362, %v351
  %v364 = vrot.slane %v355, 6
  %v365 = vsel %vm258, %v364, %v363
  %v366 = vrot.slane %v357, 5
  %v367 = vsel %vm261, %v366, %v365
  %v369 = vsel %vm264, %v367, 0.0
  %v370 = vrot.slane %v369, 4
  %v371 = vadd.f32 %v369, %v370
  %v372 = vrot.slane %v371, 2
  %v373 = vadd.f32 %v371, %v372
  %v374 = vrot.slane %v373, 1
  %v375 = vadd.f32 %v373, %v374
  %v376 = vrcp.pop %v375
  %v377 = vmul.f32 %v375, %v376
  %v378 = vsub.f32 1.0, %v377
  %v379 = vmul.f32 %v376, %v378
  %v380 = vadd.f32 %v376, %v379
  %vm381 = vweird.f32 %v375
  %vm382 = vweird.f32 %v376
  %vm383 = vmor %vm381, %vm382
  %v384 = vsel %vm383, %v376, %v380
  %v385 = vand.u32 2147483647, %v375
  %vm386 = vcmp.eq.f32.partialorder %v385, 8.507059e+37
  %v387 = vand.u32 %v375, 2147483648
  %v388 = vor.u32 1.1754944e-38, %v387
  %v389 = vsel %vm386, %v388, %v384
  %v390 = vperm.slane %v389, 0
  %v391 = vmul.f32 %v351, %v390
  %v392 = vmul.f32 %v353, %v390
  %v393 = vmul.f32 %v355, %v390
  %v394 = vmul.f32 %v357, %v390
  %v395 = vperm.slane %v391, 0
  %v396 = vperm.slane %v392, 0
  %v397 = vperm.slane %v393, 0
  %v398 = vperm.slane %v394, 0
  %v399 = vmul.f32 %v395, %v187
  %v400 = vmul.f32 %v396, %v190
  %v401 = vmul.f32 %v397, %v193
  %v402 = vmul.f32 %v398, %v196
  %v403 = vsel %vm202, %v399, 0.0
  %v404 = vsel %vm202, %v400, 0.0
  %v405 = vadd.f32 %v403, %v404
  %v406 = vsel %vm202, %v401, 0.0
  %v407 = vadd.f32 %v405, %v406
  %v408 = vsel %vm202, %v402, 0.0
  %v409 = vadd.f32 %v407, %v408
  %410 = vst.msk [vmem:[#allocation2 + $0x8] sm:$0xff] %vm202, %v409
  %v411 = vmul.f32 %v169, %v175
  %v412 = vmul.f32 %v169, %v178
  %v413 = vmul.f32 %v169, %v181
  %v414 = vmul.f32 %v169, %v184
  %v415 = vsel %vm202, %v411, 0.0
  %v416 = vrot.slane %v415, 4
  %v417 = vadd.f32 %v415, %v416
  %v418 = vrot.slane %v417, 2
  %v419 = vadd.f32 %v417, %v418
  %v420 = vrot.slane %v419, 1
  %v421 = vadd.f32 %v419, %v420
  %v422 = vsel %vm202, %v412, 0.0
  %v423 = vrot.slane %v422, 4
  %v424 = vadd.f32 %v422, %v423
  %v425 = vrot.slane %v424, 2
  %v426 = vadd.f32 %v424, %v425
  %v427 = vrot.slane %v426, 1
  %v428 = vadd.f32 %v426, %v427
  %v429 = vsel %vm202, %v413, 0.0
  %v430 = vrot.slane %v429, 4
  %v431 = vadd.f32 %v429, %v430
  %v432 = vrot.slane %v431, 2
  %v433 = vadd.f32 %v431, %v432
  %v434 = vrot.slane %v433, 1
  %v435 = vadd.f32 %v433, %v434
  %v436 = vsel %vm202, %v414, 0.0
  %v437 = vrot.slane %v436, 4
  %v438 = vadd.f32 %v436, %v437
  %v439 = vrot.slane %v438, 2
  %v440 = vadd.f32 %v438, %v439
  %v441 = vrot.slane %v440, 1
  %v442 = vadd.f32 %v440, %v441
  %v443 = vsel %vm202, %v421, -inf
  %v444 = vsel %vm202, %v428, -inf
  %v445 = vsel %vm202, %v435, -inf
  %v446 = vsel %vm202, %v442, -inf
  %v447 = vmax.f32 %v443, %v444
  %v448 = vmax.f32 %v445, %v446
  %v449 = vmax.f32 %v447, %v448
  %v450 = vsub.f32 %v421, %v449
  %v451 = vsub.f32 %v428, %v449
  %v452 = vsub.f32 %v435, %v449
  %v453 = vsub.f32 %v442, %v449
  %v454 = vmul.f32 %v450, 1.442695
  %v455 = vpow.pop %v454
  %v456 = vmul.f32 %v451, 1.442695
  %v457 = vpow.pop %v456
  %v458 = vmul.f32 %v452, 1.442695
  %v459 = vpow.pop %v458
  %v460 = vmul.f32 %v453, 1.442695
  %v461 = vpow.pop %v460
  %v466 = vrot.slane %v457, 7
  %v467 = vsel %vm255, %v466, %v455
  %v468 = vrot.slane %v459, 6
  %v469 = vsel %vm258, %v468, %v467
  %v470 = vrot.slane %v461, 5
  %v471 = vsel %vm261, %v470, %v469
  %v473 = vsel %vm264, %v471, 0.0
  %v474 = vrot.slane %v473, 4
  %v475 = vadd.f32 %v473, %v474
  %v476 = vrot.slane %v475, 2
  %v477 = vadd.f32 %v475, %v476
  %v478 = vrot.slane %v477, 1
  %v479 = vadd.f32 %v477, %v478
  %v480 = vrcp.pop %v479
  %v481 = vmul.f32 %v479, %v480
  %v482 = vsub.f32 1.0, %v481
  %v483 = vmul.f32 %v480, %v482
  %v484 = vadd.f32 %v480, %v483
  %vm485 = vweird.f32 %v479
  %vm486 = vweird.f32 %v480
  %vm487 = vmor %vm485, %vm486
  %v488 = vsel %vm487, %v480, %v484
  %v489 = vand.u32 2147483647, %v479
  %vm490 = vcmp.eq.f32.partialorder %v489, 8.507059e+37
  %v491 = vand.u32 %v479, 2147483648
  %v492 = vor.u32 1.1754944e-38, %v491
  %v493 = vsel %vm490, %v492, %v488
  %v494 = vperm.slane %v493, 0
  %v495 = vmul.f32 %v455, %v494
  %v496 = vmul.f32 %v457, %v494
  %v497 = vmul.f32 %v459, %v494
  %v498 = vmul.f32 %v461, %v494
  %v499 = vperm.slane %v495, 0
  %v500 = vperm.slane %v496, 0
  %v501 = vperm.slane %v497, 0
  %v502 = vperm.slane %v498, 0
  %v503 = vmul.f32 %v499, %v187
  %v504 = vmul.f32 %v500, %v190
  %v505 = vmul.f32 %v501, %v193
  %v506 = vmul.f32 %v502, %v196
  %v507 = vsel %vm202, %v503, 0.0
  %v508 = vsel %vm202, %v504, 0.0
  %v509 = vadd.f32 %v507, %v508
  %v510 = vsel %vm202, %v505, 0.0
  %v511 = vadd.f32 %v509, %v510
  %v512 = vsel %vm202, %v506, 0.0
  %v513 = vadd.f32 %v511, %v512
  %514 = vst.msk [vmem:[#allocation2 + $0x10] sm:$0xff] %vm202, %v513
  %v515 = vmul.f32 %v172, %v175
  %v516 = vmul.f32 %v172, %v178
  %v517 = vmul.f32 %v172, %v181
  %v518 = vmul.f32 %v172, %v184
  %v519 = vsel %vm202, %v515, 0.0
  %v520 = vrot.slane %v519, 4
  %v521 = vadd.f32 %v519, %v520
  %v522 = vrot.slane %v521, 2
  %v523 = vadd.f32 %v521, %v522
  %v524 = vrot.slane %v523, 1
  %v525 = vadd.f32 %v523, %v524
  %v526 = vsel %vm202, %v516, 0.0
  %v527 = vrot.slane %v526, 4
  %v528 = vadd.f32 %v526, %v527
  %v529 = vrot.slane %v528, 2
  %v530 = vadd.f32 %v528, %v529
  %v531 = vrot.slane %v530, 1
  %v532 = vadd.f32 %v530, %v531
  %v533 = vsel %vm202, %v517, 0.0
  %v534 = vrot.slane %v533, 4
  %v535 = vadd.f32 %v533, %v534
  %v536 = vrot.slane %v535, 2
  %v537 = vadd.f32 %v535, %v536
  %v538 = vrot.slane %v537, 1
  %v539 = vadd.f32 %v537, %v538
  %v540 = vsel %vm202, %v518, 0.0
  %v541 = vrot.slane %v540, 4
  %v542 = vadd.f32 %v540, %v541
  %v543 = vrot.slane %v542, 2
  %v544 = vadd.f32 %v542, %v543
  %v545 = vrot.slane %v544, 1
  %v546 = vadd.f32 %v544, %v545
  %v547 = vsel %vm202, %v525, -inf
  %v548 = vsel %vm202, %v532, -inf
  %v549 = vsel %vm202, %v539, -inf
  %v550 = vsel %vm202, %v546, -inf
  %v551 = vmax.f32 %v547, %v548
  %v552 = vmax.f32 %v549, %v550
  %v553 = vmax.f32 %v551, %v552
  %v554 = vsub.f32 %v525, %v553
  %v555 = vsub.f32 %v532, %v553
  %v556 = vsub.f32 %v539, %v553
  %v557 = vsub.f32 %v546, %v553
  %v558 = vmul.f32 %v554, 1.442695
  %v559 = vpow.pop %v558
  %v560 = vmul.f32 %v555, 1.442695
  %v561 = vpow.pop %v560
  %v562 = vmul.f32 %v556, 1.442695
  %v563 = vpow.pop %v562
  %v564 = vmul.f32 %v557, 1.442695
  %v565 = vpow.pop %v564
  %v570 = vrot.slane %v561, 7
  %v571 = vsel %vm255, %v570, %v559
  %v572 = vrot.slane %v563, 6
  %v573 = vsel %vm258, %v572, %v571
  %v574 = vrot.slane %v565, 5
  %v575 = vsel %vm261, %v574, %v573
  %v577 = vsel %vm264, %v575, 0.0
  %v578 = vrot.slane %v577, 4
  %v579 = vadd.f32 %v577, %v578
  %v580 = vrot.slane %v579, 2
  %v581 = vadd.f32 %v579, %v580
  %v582 = vrot.slane %v581, 1
  %v583 = vadd.f32 %v581, %v582
  %v584 = vrcp.pop %v583
  %v585 = vmul.f32 %v583, %v584
  %v586 = vsub.f32 1.0, %v585
  %v587 = vmul.f32 %v584, %v586
  %v588 = vadd.f32 %v584, %v587
  %vm589 = vweird.f32 %v583
  %vm590 = vweird.f32 %v584
  %vm591 = vmor %vm589, %vm590
  %v592 = vsel %vm591, %v584, %v588
  %v593 = vand.u32 2147483647, %v583
  %vm594 = vcmp.eq.f32.partialorder %v593, 8.507059e+37
  %v595 = vand.u32 %v583, 2147483648
  %v596 = vor.u32 1.1754944e-38, %v595
  %v597 = vsel %vm594, %v596, %v592
  %v598 = vperm.slane %v597, 0
  %v599 = vmul.f32 %v559, %v598
  %v600 = vmul.f32 %v561, %v598
  %v601 = vmul.f32 %v563, %v598
  %v602 = vmul.f32 %v565, %v598
  %v603 = vperm.slane %v599, 0
  %v604 = vperm.slane %v600, 0
  %v605 = vperm.slane %v601, 0
  %v606 = vperm.slane %v602, 0
  %v607 = vmul.f32 %v603, %v187
  %v608 = vmul.f32 %v604, %v190
  %v609 = vmul.f32 %v605, %v193
  %v610 = vmul.f32 %v606, %v196
  %v611 = vsel %vm202, %v607, 0.0
  %v612 = vsel %vm202, %v608, 0.0
  %v613 = vadd.f32 %v611, %v612
  %v614 = vsel %vm202, %v609, 0.0
  %v615 = vadd.f32 %v613, %v614
  %v616 = vsel %vm202, %v610, 0.0
  %v617 = vadd.f32 %v615, %v616
  %618 = vst.msk [vmem:[#allocation2 + $0x18] sm:$0xff] %vm202, %v617
  %v619 = vld [vmem:[%s3] sm:$0xff]
  %v620 = vld [vmem:[%s3 + $0x8] sm:$0xff]
  %v621 = vld [vmem:[%s3 + $0x10] sm:$0xff]
  %v622 = vld [vmem:[%s3 + $0x18] sm:$0xff]
  %v623 = vld [vmem:[#allocation2] sm:$0xff]
  %v624 = vld [vmem:[#allocation2 + $0x8] sm:$0xff]
  %v625 = vld [vmem:[#allocation2 + $0x10] sm:$0xff]
  %v626 = vld [vmem:[#allocation2 + $0x18] sm:$0xff]
  %v627 = vld [vmem:[%s4] sm:$0xff]
  %v628 = vld [vmem:[%s4 + $0x8] sm:$0xff]
  %v629 = vld [vmem:[%s4 + $0x10] sm:$0xff]
  %v630 = vld [vmem:[%s4 + $0x18] sm:$0xff]
  %632 = vset.pattern.permute.xlu0 0
  %633 = vperm.xlu0 %632, %v627
  %v634 = vpop.permute.xlu0 %633
  %637 = vset.pattern.permute.xlu0 0
  %638 = vperm.xlu0 %637, %v628
  %v639 = vpop.permute.xlu0 %638
  %642 = vset.pattern.permute.xlu0 0
  %643 = vperm.xlu0 %642, %v629
  %v644 = vpop.permute.xlu0 %643
  %647 = vset.pattern.permute.xlu0 0
  %648 = vperm.xlu0 %647, %v630
  %v649 = vpop.permute.xlu0 %648
  %v651 = vadd.f32 %v20, %v634
  %v652 = vadd.f32 %v21, %v639
  %v653 = vadd.f32 %v22, %v644
  %v654 = vadd.f32 %v23, %v649
  %v656 = vsel %vm108, %v619, 0
  %v659 = vsel %vm108, %v620, 0
  %v662 = vsel %vm108, %v621, 0
  %v665 = vsel %vm108, %v622, 0
  %667 = vmatpush.msra.mxu0 0.0
  %668 = vmatpush.msra.mxu0 0.0
  %669 = vmatpush.msra.mxu0 0.0
  %670 = vmatpush.msra.mxu0 0.0
  %671 = vmatpush.msra.mxu0 0.0
  %672 = vmatpush.msra.mxu0 0.0
  %673 = vmatpush.msra.mxu0 0.0
  %674 = vmatpush.msra.mxu0 0.0
  %675 = vmatpush.msra.mxu0 0.0
  %676 = vmatpush.msra.mxu0 0.0
  %677 = vmatpush.msra.mxu0 0.0
  %678 = vmatpush.msra.mxu0 0.0
  %679 = vmatpush.msra.mxu0 %v626
  %680 = vmatpush.msra.mxu0 %v625
  %681 = vmatpush.msra.mxu0 %v624
  %682 = vmatpush.msra.mxu0 %v623
  %683 = vmatmul.f32.gmra.mxu0 %v656
  %v684 = vpop.f32.mrf.mxu0
  %v685 = vadd.f32 %v651, %v684
  %686 = vmatmul.f32.gmra.mxu0 %v659
  %v687 = vpop.f32.mrf.mxu0
  %v688 = vadd.f32 %v652, %v687
  %689 = vmatmul.f32.gmra.mxu0 %v662
  %v690 = vpop.f32.mrf.mxu0
  %v691 = vadd.f32 %v653, %v690
  %692 = vmatmul.f32.gmra.mxu0 %v665
  %v693 = vpop.f32.mrf.mxu0
  %v694 = vadd.f32 %v654, %v693
  %695 = vdwg.mxu0
  %696 = vst.msk [vmem:[%s5] sm:$0xff] %vm202, %v685
  %697 = vst.msk [vmem:[%s5 + $0x8] sm:$0xff] %vm202, %v688
  %698 = vst.msk [vmem:[%s5 + $0x10] sm:$0xff] %vm202, %v691
  %699 = vst.msk [vmem:[%s5 + $0x18] sm:$0xff] %vm202, %v694
  // Predicated region
  $region22: #{tpu_custom_call.1} parent=0 // pred_check
    _
  $region23: #{tpu_custom_call.1} parent=0 // pred_check_branch
    %701 = sbr.rel (0) target = $region25
  $region24: #{tpu_custom_call.1} parent=0 // pred_region
    _
  $region25: #{tpu_custom_call.1} parent=0 // pred_fallthru
    _
  // Predicated region
  $region26: #{tpu_custom_call.1} parent=0 // pred_check
    _
  $region27: #{tpu_custom_call.1} parent=0 // pred_check_branch
    %703 = sbr.rel (0) target = $region29
  $region28: #{tpu_custom_call.1} parent=0 // pred_region
    _
  $region29: #{tpu_custom_call.1} parent=0 // pred_fallthru
    _

</llo_original>
